<compile_context>
chip_gen: v5e
topology: v5e:2x2
jax: 0.10.0
libtpu: 0.0.40
codegen_flags: <defaults>
</compile_context>

<pallas_src>
import functools
import math

import jax
import jax.numpy as jnp
from jax import lax
from jax.experimental import pallas as pl
from jax.experimental.pallas import tpu as pltpu

EPS = 1e-5


def _layernorm(x, gamma, beta):
    mean = jnp.mean(x, axis=-1, keepdims=True)
    var = jnp.mean((x - mean) ** 2, axis=-1, keepdims=True)
    return (x - mean) * lax.rsqrt(var + EPS) * gamma + beta


def encoder_layer_kernel(
    x_ref,
    wqkv_ref, bqkv_ref, wo_ref, bo_ref,
    g1_ref, be1_ref,
    w1_ref, bf1_ref, w2_ref, bf2_ref,
    g2_ref, be2_ref,
    o_ref,
    *, num_heads: int,
):
    Bt, S, D = x_ref.shape
    H = num_heads
    dh = D // H
    scale = 1.0 / math.sqrt(dh)

    # Flatten batch tile for the dense projections / FFN (taller M for the MXU).
    # Safe relayout: Bt == 1, or S is a multiple of the 8-row sublane tile
    # (guaranteed by the wrapper's batch-tile selection).
    x = x_ref[...].reshape(Bt * S, D)               # f32
    xb = x.astype(jnp.bfloat16)

    # ---- fused QKV projection (one wide MXU pass) ------------------------
    qkv = jnp.dot(xb, wqkv_ref[...], preferred_element_type=jnp.float32) + bqkv_ref[...]
    q = qkv[:, 0 * D:1 * D]
    k = qkv[:, 1 * D:2 * D]
    v = qkv[:, 2 * D:3 * D]

    # ---- relayout heads to a leading batch axis: (Bt*H, S, dh) -----------
    def split_heads(t):
        return jnp.stack(
            [t[b * S:(b + 1) * S, h * dh:(h + 1) * dh]
             for b in range(Bt) for h in range(H)],
            axis=0,
        ).astype(jnp.bfloat16)

    qh = split_heads(q)
    kh = split_heads(k)
    vh = split_heads(v)

    # ---- batched attention over all (batch row, head) pairs --------------
    # Contraction over the last dim of both operands: no materialized K^T.
    scores = jnp.einsum("nqd,nkd->nqk", qh, kh,
                        preferred_element_type=jnp.float32) * scale
    scores = scores - jnp.max(scores, axis=-1, keepdims=True)
    e = jnp.exp(scores)
    attn = e * pl.reciprocal(jnp.sum(e, axis=-1, keepdims=True), approx=True)
    ctx = jnp.einsum("nqk,nkd->nqd", attn.astype(jnp.bfloat16), vh,
                     preferred_element_type=jnp.float32)     # (Bt*H, S, dh)

    # merge heads back to (Bt*S, D)
    ctx2d = jnp.concatenate(
        [jnp.concatenate([ctx[b * H + h] for h in range(H)], axis=-1)
         for b in range(Bt)],
        axis=0,
    )

    attn_out = jnp.dot(ctx2d.astype(jnp.bfloat16), wo_ref[...],
                       preferred_element_type=jnp.float32) + bo_ref[...]

    # residual + LayerNorm 1  (dropout1 = identity in eval)
    y = _layernorm(x + attn_out, g1_ref[...], be1_ref[...])

    # ---- position-wise feed forward --------------------------------------
    hdn = jnp.dot(y.astype(jnp.bfloat16), w1_ref[...],
                  preferred_element_type=jnp.float32) + bf1_ref[...]
    hdn = jnp.maximum(hdn, 0.0)                    # ReLU (ffn dropout = identity)
    ff = jnp.dot(hdn.astype(jnp.bfloat16), w2_ref[...],
                 preferred_element_type=jnp.float32) + bf2_ref[...]

    # residual + LayerNorm 2  (dropout2 = identity in eval)
    out = _layernorm(y + ff, g2_ref[...], be2_ref[...])
    o_ref[...] = out.reshape(Bt, S, D)


def _pick_batch_tile(B, S, D, H, ff_dim, budget_bytes=6 * 1024 * 1024):
    """Largest divisor of B whose per-step activation footprint fits a budget."""
    if S % 8 != 0:           # keep the (Bt,S,D)<->(Bt*S,D) relayout trivial
        return 1
    best = 1
    for bt in range(1, B + 1):
        if B % bt:
            continue
        acts = bt * S * (3 * D + 4 * D + ff_dim) * 4 + 3 * bt * H * S * S * 4
        if acts <= budget_bytes:
            best = bt
    return best


def _vmem_limit_bytes(Bt, S, D, H, ff_dim):
    bf16, f32 = 2, 4
    dh = D // H
    weights = (D * 3 * D + D * D + D * ff_dim + ff_dim * D) * bf16
    vectors = (3 * D + 6 * D + ff_dim) * f32
    io = 2 * Bt * S * D * f32
    acts = Bt * S * (3 * D + 4 * D + ff_dim) * f32
    heads = 3 * Bt * H * S * dh * bf16 + 3 * Bt * H * S * S * f32
    est = 2 * (weights + vectors + io) + 2 * (acts + heads)   # dbl-buffer + slack
    return int(min(64 * 1024 * 1024, max(16 * 1024 * 1024, est)))


def encoder_layer(x, params, num_heads):
    B, S, D = x.shape
    ff_dim = params["w1"].shape[1]
    H = num_heads
    Bt = _pick_batch_tile(B, S, D, H, ff_dim)

    # Fuse QKV weights / biases; cast matmul weights to bf16 (MXU-native).
    # Biases and LayerNorm params stay f32 (added / applied after f32 accumulation).
    wqkv = jnp.concatenate(
        [params["wq"], params["wk"], params["wv"]], axis=1).astype(jnp.bfloat16)
    bqkv = jnp.concatenate([params["bq"], params["bk"], params["bv"]], axis=1)
    wo = params["wo"].astype(jnp.bfloat16)
    w1 = params["w1"].astype(jnp.bfloat16)
    w2 = params["w2"].astype(jnp.bfloat16)

    def full(shape):
        # Constant-index parameter block: fetched once, resident across the grid.
        # (pipeline_mode=pl.Buffered(1) could halve its VMEM footprint on v7x.)
        return pl.BlockSpec(shape, lambda b: tuple(0 for _ in shape))

    in_specs = [
        pl.BlockSpec((Bt, S, D), lambda b: (b, 0, 0)),   # x
        full((D, 3 * D)), full((1, 3 * D)),              # wqkv, bqkv
        full((D, D)), full((1, D)),                      # wo, bo
        full((1, D)), full((1, D)),                      # gamma1, beta1
        full((D, ff_dim)), full((1, ff_dim)),            # w1, b1
        full((ff_dim, D)), full((1, D)),                 # w2, b2
        full((1, D)), full((1, D)),                      # gamma2, beta2
    ]

    kernel = functools.partial(encoder_layer_kernel, num_heads=num_heads)

    return pl.pallas_call(
        kernel,
        out_shape=jax.ShapeDtypeStruct((B, S, D), jnp.float32),
        grid=(B // Bt,),
        in_specs=in_specs,
        out_specs=pl.BlockSpec((Bt, S, D), lambda b: (b, 0, 0)),
        compiler_params=pltpu.CompilerParams(
            dimension_semantics=("parallel",),
            vmem_limit_bytes=_vmem_limit_bytes(Bt, S, D, H, ff_dim)),
    )(
        x,
        wqkv, bqkv, wo, params["bo"],
        params["g1"], params["be1"],
        w1, params["bf1"], w2, params["bf2"],
        params["g2"], params["be2"],
    )


def reference_encoder_layer(x, params, num_heads):
    """Pure-JAX f32 reference (same math) for validation."""
    B, S, D = x.shape
    dh = D // num_heads
    q = x @ params["wq"] + params["bq"]
    k = x @ params["wk"] + params["bk"]
    v = x @ params["wv"] + params["bv"]

    def split(t):  # (B,S,D) -> (B,H,S,dh)
        return t.reshape(B, S, num_heads, dh).transpose(0, 2, 1, 3)

    qh, kh, vh = split(q), split(k), split(v)
    scores = jnp.einsum("bhqd,bhkd->bhqk", qh, kh) / math.sqrt(dh)
    attn = jax.nn.softmax(scores, axis=-1)
    ctx = jnp.einsum("bhqk,bhkd->bhqd", attn, vh).transpose(0, 2, 1, 3).reshape(B, S, D)
    attn_out = ctx @ params["wo"] + params["bo"]

    def ln(t, g, b):
        m = t.mean(-1, keepdims=True)
        var = ((t - m) ** 2).mean(-1, keepdims=True)
        return (t - m) / jnp.sqrt(var + EPS) * g + b

    y = ln(x + attn_out, params["g1"], params["be1"])
    h = jnp.maximum(y @ params["w1"] + params["bf1"], 0.0)
    ff = h @ params["w2"] + params["bf2"]
    return ln(y + ff, params["g2"], params["be2"])


def init_params(key, embed_dim, ff_dim):
    keys = jax.random.split(key, 10)
    s = 0.05
    return {
        "wq": jax.random.normal(keys[0], (embed_dim, embed_dim), jnp.float32) * s,
        "wk": jax.random.normal(keys[1], (embed_dim, embed_dim), jnp.float32) * s,
        "wv": jax.random.normal(keys[2], (embed_dim, embed_dim), jnp.float32) * s,
        "wo": jax.random.normal(keys[3], (embed_dim, embed_dim), jnp.float32) * s,
        "bq": jax.random.normal(keys[4], (1, embed_dim), jnp.float32) * s,
        "bk": jax.random.normal(keys[5], (1, embed_dim), jnp.float32) * s,
        "bv": jax.random.normal(keys[6], (1, embed_dim), jnp.float32) * s,
        "bo": jax.random.normal(keys[7], (1, embed_dim), jnp.float32) * s,
        "w1": jax.random.normal(keys[8], (embed_dim, ff_dim), jnp.float32) * s,
        "bf1": jnp.zeros((1, ff_dim), jnp.float32),
        "w2": jax.random.normal(keys[9], (ff_dim, embed_dim), jnp.float32) * s,
        "bf2": jnp.zeros((1, embed_dim), jnp.float32),
        "g1": jnp.ones((1, embed_dim), jnp.float32),
        "be1": jnp.zeros((1, embed_dim), jnp.float32),
        "g2": jnp.ones((1, embed_dim), jnp.float32),
        "be2": jnp.zeros((1, embed_dim), jnp.float32),
    }


if __name__ == "__main__":
    B, S, D, H, FF = 2, 8, 32, 4, 64
    key = jax.random.PRNGKey(0)
    kx, kp = jax.random.split(key)
    x = jax.random.normal(kx, (B, S, D), jnp.float32)
    params = init_params(kp, D, FF)

    out = encoder_layer(x, params, num_heads=H)
    out = jax.block_until_ready(out)

    ref = reference_encoder_layer(x, params, num_heads=H)
    assert out.shape == (B, S, D)
    # bf16 MXU inputs + approx EUP reciprocal loosen agreement vs the f32 reference.
    assert jnp.allclose(out, ref, atol=5e-2, rtol=5e-2), "mismatch vs JAX reference"

    print("KERNEL_OK")
</pallas_src>

<mosaic_0001>
module attributes {stable_mosaic.version = 11 : i64} {
  func.func @encoder_layer_kernel(%arg0: i32, %arg1: memref<2x8x32xf32, #tpu.memory_space<vmem>>, %arg2: memref<32x96xbf16, #tpu.memory_space<vmem>>, %arg3: memref<1x96xf32, #tpu.memory_space<vmem>>, %arg4: memref<32x32xbf16, #tpu.memory_space<vmem>>, %arg5: memref<1x32xf32, #tpu.memory_space<vmem>>, %arg6: memref<1x32xf32, #tpu.memory_space<vmem>>, %arg7: memref<1x32xf32, #tpu.memory_space<vmem>>, %arg8: memref<32x64xbf16, #tpu.memory_space<vmem>>, %arg9: memref<1x64xf32, #tpu.memory_space<vmem>>, %arg10: memref<64x32xbf16, #tpu.memory_space<vmem>>, %arg11: memref<1x32xf32, #tpu.memory_space<vmem>>, %arg12: memref<1x32xf32, #tpu.memory_space<vmem>>, %arg13: memref<1x32xf32, #tpu.memory_space<vmem>>, %arg14: memref<2x8x32xf32, #tpu.memory_space<vmem>>) attributes {dimension_semantics = [#tpu.dimension_semantics<parallel>], iteration_bounds = array<i64: 1>, scalar_prefetch = 0 : i64, scratch_operands = 0 : i64, tpu.core_type = #tpu.core_type<tc>, window_params = [{transform_indices = @transform_0, window_bounds = array<i64: 2, 8, 32>}, {pipeline_mode = #tpu.pipeline_mode<synchronous>, transform_indices = @transform_1, window_bounds = array<i64: 32, 96>}, {pipeline_mode = #tpu.pipeline_mode<synchronous>, transform_indices = @transform_2, window_bounds = array<i64: 1, 96>}, {pipeline_mode = #tpu.pipeline_mode<synchronous>, transform_indices = @transform_3, window_bounds = array<i64: 32, 32>}, {pipeline_mode = #tpu.pipeline_mode<synchronous>, transform_indices = @transform_4, window_bounds = array<i64: 1, 32>}, {pipeline_mode = #tpu.pipeline_mode<synchronous>, transform_indices = @transform_5, window_bounds = array<i64: 1, 32>}, {pipeline_mode = #tpu.pipeline_mode<synchronous>, transform_indices = @transform_6, window_bounds = array<i64: 1, 32>}, {pipeline_mode = #tpu.pipeline_mode<synchronous>, transform_indices = @transform_7, window_bounds = array<i64: 32, 64>}, {pipeline_mode = #tpu.pipeline_mode<synchronous>, transform_indices = @transform_8, window_bounds = array<i64: 1, 64>}, {pipeline_mode = #tpu.pipeline_mode<synchronous>, transform_indices = @transform_9, window_bounds = array<i64: 64, 32>}, {pipeline_mode = #tpu.pipeline_mode<synchronous>, transform_indices = @transform_10, window_bounds = array<i64: 1, 32>}, {pipeline_mode = #tpu.pipeline_mode<synchronous>, transform_indices = @transform_11, window_bounds = array<i64: 1, 32>}, {pipeline_mode = #tpu.pipeline_mode<synchronous>, transform_indices = @transform_12, window_bounds = array<i64: 1, 32>}, {transform_indices = @transform_13, window_bounds = array<i64: 2, 8, 32>}]} {
    %c0 = arith.constant 0 : index
    %c0_0 = arith.constant 0 : index
    %c0_1 = arith.constant 0 : index
    %0 = vector.load %arg1[%c0, %c0_0, %c0_1] : memref<2x8x32xf32, #tpu.memory_space<vmem>>, vector<2x8x32xf32>
    %1 = vector.shape_cast %0 : vector<2x8x32xf32> to vector<16x32xf32>
    %2 = arith.truncf %1 : vector<16x32xf32> to vector<16x32xbf16>
    %c0_2 = arith.constant 0 : index
    %c0_3 = arith.constant 0 : index
    %3 = vector.load %arg2[%c0_2, %c0_3] : memref<32x96xbf16, #tpu.memory_space<vmem>>, vector<32x96xbf16>
    %cst = arith.constant dense<0.000000e+00> : vector<16x96xf32>
    %4 = tpu.matmul %2, %3, %cst {dimension_numbers = #tpu.dot_dimension_numbers<[1], [0], [0], [1], [0, 0, 1, 1], [], []>} : vector<16x32xbf16>, vector<32x96xbf16>, vector<16x96xf32> -> vector<16x96xf32>
    %c0_4 = arith.constant 0 : index
    %c0_5 = arith.constant 0 : index
    %5 = vector.load %arg3[%c0_4, %c0_5] : memref<1x96xf32, #tpu.memory_space<vmem>>, vector<1x96xf32>
    %6 = vector.broadcast %5 : vector<1x96xf32> to vector<16x96xf32>
    %7 = arith.addf %4, %6 : vector<16x96xf32>
    %8 = vector.extract_strided_slice %7 {offsets = [0, 0], sizes = [16, 32], strides = [1, 1]} : vector<16x96xf32> to vector<16x32xf32>
    %9 = vector.extract_strided_slice %7 {offsets = [0, 32], sizes = [16, 32], strides = [1, 1]} : vector<16x96xf32> to vector<16x32xf32>
    %10 = vector.extract_strided_slice %7 {offsets = [0, 64], sizes = [16, 32], strides = [1, 1]} : vector<16x96xf32> to vector<16x32xf32>
    %11 = vector.extract_strided_slice %8 {offsets = [0, 0], sizes = [8, 8], strides = [1, 1]} : vector<16x32xf32> to vector<8x8xf32>
    %12 = vector.extract_strided_slice %8 {offsets = [0, 8], sizes = [8, 8], strides = [1, 1]} : vector<16x32xf32> to vector<8x8xf32>
    %13 = vector.extract_strided_slice %8 {offsets = [0, 16], sizes = [8, 8], strides = [1, 1]} : vector<16x32xf32> to vector<8x8xf32>
    %14 = vector.extract_strided_slice %8 {offsets = [0, 24], sizes = [8, 8], strides = [1, 1]} : vector<16x32xf32> to vector<8x8xf32>
    %15 = vector.extract_strided_slice %8 {offsets = [8, 0], sizes = [8, 8], strides = [1, 1]} : vector<16x32xf32> to vector<8x8xf32>
    %16 = vector.extract_strided_slice %8 {offsets = [8, 8], sizes = [8, 8], strides = [1, 1]} : vector<16x32xf32> to vector<8x8xf32>
    %17 = vector.extract_strided_slice %8 {offsets = [8, 16], sizes = [8, 8], strides = [1, 1]} : vector<16x32xf32> to vector<8x8xf32>
    %18 = vector.extract_strided_slice %8 {offsets = [8, 24], sizes = [8, 8], strides = [1, 1]} : vector<16x32xf32> to vector<8x8xf32>
    %19 = vector.shape_cast %11 : vector<8x8xf32> to vector<1x8x8xf32>
    %20 = vector.shape_cast %12 : vector<8x8xf32> to vector<1x8x8xf32>
    %21 = vector.shape_cast %13 : vector<8x8xf32> to vector<1x8x8xf32>
    %22 = vector.shape_cast %14 : vector<8x8xf32> to vector<1x8x8xf32>
    %23 = vector.shape_cast %15 : vector<8x8xf32> to vector<1x8x8xf32>
    %24 = vector.shape_cast %16 : vector<8x8xf32> to vector<1x8x8xf32>
    %25 = vector.shape_cast %17 : vector<8x8xf32> to vector<1x8x8xf32>
    %26 = vector.shape_cast %18 : vector<8x8xf32> to vector<1x8x8xf32>
    %27 = tpu.concatenate %19, %20, %21, %22, %23, %24, %25, %26 in 0 : vector<1x8x8xf32>, vector<1x8x8xf32>, vector<1x8x8xf32>, vector<1x8x8xf32>, vector<1x8x8xf32>, vector<1x8x8xf32>, vector<1x8x8xf32>, vector<1x8x8xf32> -> vector<8x8x8xf32>
    %28 = arith.truncf %27 : vector<8x8x8xf32> to vector<8x8x8xbf16>
    %29 = vector.extract_strided_slice %9 {offsets = [0, 0], sizes = [8, 8], strides = [1, 1]} : vector<16x32xf32> to vector<8x8xf32>
    %30 = vector.extract_strided_slice %9 {offsets = [0, 8], sizes = [8, 8], strides = [1, 1]} : vector<16x32xf32> to vector<8x8xf32>
    %31 = vector.extract_strided_slice %9 {offsets = [0, 16], sizes = [8, 8], strides = [1, 1]} : vector<16x32xf32> to vector<8x8xf32>
    %32 = vector.extract_strided_slice %9 {offsets = [0, 24], sizes = [8, 8], strides = [1, 1]} : vector<16x32xf32> to vector<8x8xf32>
    %33 = vector.extract_strided_slice %9 {offsets = [8, 0], sizes = [8, 8], strides = [1, 1]} : vector<16x32xf32> to vector<8x8xf32>
    %34 = vector.extract_strided_slice %9 {offsets = [8, 8], sizes = [8, 8], strides = [1, 1]} : vector<16x32xf32> to vector<8x8xf32>
    %35 = vector.extract_strided_slice %9 {offsets = [8, 16], sizes = [8, 8], strides = [1, 1]} : vector<16x32xf32> to vector<8x8xf32>
    %36 = vector.extract_strided_slice %9 {offsets = [8, 24], sizes = [8, 8], strides = [1, 1]} : vector<16x32xf32> to vector<8x8xf32>
    %37 = vector.shape_cast %29 : vector<8x8xf32> to vector<1x8x8xf32>
    %38 = vector.shape_cast %30 : vector<8x8xf32> to vector<1x8x8xf32>
    %39 = vector.shape_cast %31 : vector<8x8xf32> to vector<1x8x8xf32>
    %40 = vector.shape_cast %32 : vector<8x8xf32> to vector<1x8x8xf32>
    %41 = vector.shape_cast %33 : vector<8x8xf32> to vector<1x8x8xf32>
    %42 = vector.shape_cast %34 : vector<8x8xf32> to vector<1x8x8xf32>
    %43 = vector.shape_cast %35 : vector<8x8xf32> to vector<1x8x8xf32>
    %44 = vector.shape_cast %36 : vector<8x8xf32> to vector<1x8x8xf32>
    %45 = tpu.concatenate %37, %38, %39, %40, %41, %42, %43, %44 in 0 : vector<1x8x8xf32>, vector<1x8x8xf32>, vector<1x8x8xf32>, vector<1x8x8xf32>, vector<1x8x8xf32>, vector<1x8x8xf32>, vector<1x8x8xf32>, vector<1x8x8xf32> -> vector<8x8x8xf32>
    %46 = arith.truncf %45 : vector<8x8x8xf32> to vector<8x8x8xbf16>
    %47 = vector.extract_strided_slice %10 {offsets = [0, 0], sizes = [8, 8], strides = [1, 1]} : vector<16x32xf32> to vector<8x8xf32>
    %48 = vector.extract_strided_slice %10 {offsets = [0, 8], sizes = [8, 8], strides = [1, 1]} : vector<16x32xf32> to vector<8x8xf32>
    %49 = vector.extract_strided_slice %10 {offsets = [0, 16], sizes = [8, 8], strides = [1, 1]} : vector<16x32xf32> to vector<8x8xf32>
    %50 = vector.extract_strided_slice %10 {offsets = [0, 24], sizes = [8, 8], strides = [1, 1]} : vector<16x32xf32> to vector<8x8xf32>
    %51 = vector.extract_strided_slice %10 {offsets = [8, 0], sizes = [8, 8], strides = [1, 1]} : vector<16x32xf32> to vector<8x8xf32>
    %52 = vector.extract_strided_slice %10 {offsets = [8, 8], sizes = [8, 8], strides = [1, 1]} : vector<16x32xf32> to vector<8x8xf32>
    %53 = vector.extract_strided_slice %10 {offsets = [8, 16], sizes = [8, 8], strides = [1, 1]} : vector<16x32xf32> to vector<8x8xf32>
    %54 = vector.extract_strided_slice %10 {offsets = [8, 24], sizes = [8, 8], strides = [1, 1]} : vector<16x32xf32> to vector<8x8xf32>
    %55 = vector.shape_cast %47 : vector<8x8xf32> to vector<1x8x8xf32>
    %56 = vector.shape_cast %48 : vector<8x8xf32> to vector<1x8x8xf32>
    %57 = vector.shape_cast %49 : vector<8x8xf32> to vector<1x8x8xf32>
    %58 = vector.shape_cast %50 : vector<8x8xf32> to vector<1x8x8xf32>
    %59 = vector.shape_cast %51 : vector<8x8xf32> to vector<1x8x8xf32>
    %60 = vector.shape_cast %52 : vector<8x8xf32> to vector<1x8x8xf32>
    %61 = vector.shape_cast %53 : vector<8x8xf32> to vector<1x8x8xf32>
    %62 = vector.shape_cast %54 : vector<8x8xf32> to vector<1x8x8xf32>
    %63 = tpu.concatenate %55, %56, %57, %58, %59, %60, %61, %62 in 0 : vector<1x8x8xf32>, vector<1x8x8xf32>, vector<1x8x8xf32>, vector<1x8x8xf32>, vector<1x8x8xf32>, vector<1x8x8xf32>, vector<1x8x8xf32>, vector<1x8x8xf32> -> vector<8x8x8xf32>
    %64 = arith.truncf %63 : vector<8x8x8xf32> to vector<8x8x8xbf16>
    "tpu.trace_start"() <{level = 10 : i32, message = "nqd,nkd->nqk"}> : () -> ()
    %cst_6 = arith.constant dense<0.000000e+00> : vector<8x8x8xf32>
    %65 = tpu.matmul %28, %46, %cst_6 {dimension_numbers = #tpu.dot_dimension_numbers<[2], [2], [1], [1], [0, 0, 0, 1, 1, 1], [0], [0]>} : vector<8x8x8xbf16>, vector<8x8x8xbf16>, vector<8x8x8xf32> -> vector<8x8x8xf32>
    "tpu.trace_stop"() : () -> ()
    %cst_7 = arith.constant 0.353553385 : f32
    %66 = vector.broadcast %cst_7 : f32 to vector<8x8x8xf32>
    %67 = arith.mulf %65, %66 : vector<8x8x8xf32>
    %cst_8 = arith.constant dense<0xFF800000> : vector<8x8xf32>
    %68 = vector.multi_reduction <maximumf>, %67, %cst_8 [2] : vector<8x8x8xf32> to vector<8x8xf32>
    %69 = vector.shape_cast %68 : vector<8x8xf32> to vector<8x8x1xf32>
    %70 = vector.broadcast %69 : vector<8x8x1xf32> to vector<8x8x8xf32>
    %71 = arith.subf %67, %70 : vector<8x8x8xf32>
    %72 = math.exp %71 : vector<8x8x8xf32>
    %cst_9 = arith.constant dense<0.000000e+00> : vector<8x8xf32>
    %73 = vector.multi_reduction <add>, %72, %cst_9 [2] : vector<8x8x8xf32> to vector<8x8xf32>
    %74 = vector.shape_cast %73 : vector<8x8xf32> to vector<8x8x1xf32>
    %75 = tpu.reciprocal %74 {approx = true} : vector<8x8x1xf32> -> vector<8x8x1xf32>
    %76 = vector.broadcast %75 : vector<8x8x1xf32> to vector<8x8x8xf32>
    %77 = arith.mulf %72, %76 : vector<8x8x8xf32>
    %78 = arith.truncf %77 : vector<8x8x8xf32> to vector<8x8x8xbf16>
    "tpu.trace_start"() <{level = 10 : i32, message = "nqk,nkd->nqd"}> : () -> ()
    %cst_10 = arith.constant dense<0.000000e+00> : vector<8x8x8xf32>
    %79 = tpu.matmul %78, %64, %cst_10 {dimension_numbers = #tpu.dot_dimension_numbers<[2], [1], [1], [2], [0, 0, 0, 1, 1, 2], [0], [0]>} : vector<8x8x8xbf16>, vector<8x8x8xbf16>, vector<8x8x8xf32> -> vector<8x8x8xf32>
    "tpu.trace_stop"() : () -> ()
    %80 = vector.extract_strided_slice %79 {offsets = [0, 0, 0], sizes = [1, 8, 8], strides = [1, 1, 1]} : vector<8x8x8xf32> to vector<1x8x8xf32>
    %81 = vector.shape_cast %80 : vector<1x8x8xf32> to vector<8x8xf32>
    %82 = vector.extract_strided_slice %79 {offsets = [1, 0, 0], sizes = [1, 8, 8], strides = [1, 1, 1]} : vector<8x8x8xf32> to vector<1x8x8xf32>
    %83 = vector.shape_cast %82 : vector<1x8x8xf32> to vector<8x8xf32>
    %84 = vector.extract_strided_slice %79 {offsets = [2, 0, 0], sizes = [1, 8, 8], strides = [1, 1, 1]} : vector<8x8x8xf32> to vector<1x8x8xf32>
    %85 = vector.shape_cast %84 : vector<1x8x8xf32> to vector<8x8xf32>
    %86 = vector.extract_strided_slice %79 {offsets = [3, 0, 0], sizes = [1, 8, 8], strides = [1, 1, 1]} : vector<8x8x8xf32> to vector<1x8x8xf32>
    %87 = vector.shape_cast %86 : vector<1x8x8xf32> to vector<8x8xf32>
    %88 = tpu.concatenate %81, %83, %85, %87 in 1 : vector<8x8xf32>, vector<8x8xf32>, vector<8x8xf32>, vector<8x8xf32> -> vector<8x32xf32>
    %89 = vector.extract_strided_slice %79 {offsets = [4, 0, 0], sizes = [1, 8, 8], strides = [1, 1, 1]} : vector<8x8x8xf32> to vector<1x8x8xf32>
    %90 = vector.shape_cast %89 : vector<1x8x8xf32> to vector<8x8xf32>
    %91 = vector.extract_strided_slice %79 {offsets = [5, 0, 0], sizes = [1, 8, 8], strides = [1, 1, 1]} : vector<8x8x8xf32> to vector<1x8x8xf32>
    %92 = vector.shape_cast %91 : vector<1x8x8xf32> to vector<8x8xf32>
    %93 = vector.extract_strided_slice %79 {offsets = [6, 0, 0], sizes = [1, 8, 8], strides = [1, 1, 1]} : vector<8x8x8xf32> to vector<1x8x8xf32>
    %94 = vector.shape_cast %93 : vector<1x8x8xf32> to vector<8x8xf32>
    %95 = vector.extract_strided_slice %79 {offsets = [7, 0, 0], sizes = [1, 8, 8], strides = [1, 1, 1]} : vector<8x8x8xf32> to vector<1x8x8xf32>
    %96 = vector.shape_cast %95 : vector<1x8x8xf32> to vector<8x8xf32>
    %97 = tpu.concatenate %90, %92, %94, %96 in 1 : vector<8x8xf32>, vector<8x8xf32>, vector<8x8xf32>, vector<8x8xf32> -> vector<8x32xf32>
    %98 = tpu.concatenate %88, %97 in 0 : vector<8x32xf32>, vector<8x32xf32> -> vector<16x32xf32>
    %99 = arith.truncf %98 : vector<16x32xf32> to vector<16x32xbf16>
    %c0_11 = arith.constant 0 : index
    %c0_12 = arith.constant 0 : index
    %100 = vector.load %arg4[%c0_11, %c0_12] : memref<32x32xbf16, #tpu.memory_space<vmem>>, vector<32x32xbf16>
    %cst_13 = arith.constant dense<0.000000e+00> : vector<16x32xf32>
    %101 = tpu.matmul %99, %100, %cst_13 {dimension_numbers = #tpu.dot_dimension_numbers<[1], [0], [0], [1], [0, 0, 1, 1], [], []>} : vector<16x32xbf16>, vector<32x32xbf16>, vector<16x32xf32> -> vector<16x32xf32>
    %c0_14 = arith.constant 0 : index
    %c0_15 = arith.constant 0 : index
    %102 = vector.load %arg5[%c0_14, %c0_15] : memref<1x32xf32, #tpu.memory_space<vmem>>, vector<1x32xf32>
    %103 = vector.broadcast %102 : vector<1x32xf32> to vector<16x32xf32>
    %104 = arith.addf %101, %103 : vector<16x32xf32>
    %105 = arith.addf %1, %104 : vector<16x32xf32>
    %c0_16 = arith.constant 0 : index
    %c0_17 = arith.constant 0 : index
    %106 = vector.load %arg6[%c0_16, %c0_17] : memref<1x32xf32, #tpu.memory_space<vmem>>, vector<1x32xf32>
    %c0_18 = arith.constant 0 : index
    %c0_19 = arith.constant 0 : index
    %107 = vector.load %arg7[%c0_18, %c0_19] : memref<1x32xf32, #tpu.memory_space<vmem>>, vector<1x32xf32>
    %cst_20 = arith.constant dense<0.000000e+00> : vector<16xf32>
    %108 = vector.multi_reduction <add>, %105, %cst_20 [1] : vector<16x32xf32> to vector<16xf32>
    %109 = vector.shape_cast %108 : vector<16xf32> to vector<16x1xf32>
    %cst_21 = arith.constant 3.200000e+01 : f32
    %110 = vector.broadcast %cst_21 : f32 to vector<16x1xf32>
    %111 = arith.divf %109, %110 : vector<16x1xf32>
    %112 = vector.broadcast %111 : vector<16x1xf32> to vector<16x32xf32>
    %113 = arith.subf %105, %112 : vector<16x32xf32>
    %114 = arith.mulf %113, %113 : vector<16x32xf32>
    %cst_22 = arith.constant dense<0.000000e+00> : vector<16xf32>
    %115 = vector.multi_reduction <add>, %114, %cst_22 [1] : vector<16x32xf32> to vector<16xf32>
    %116 = vector.shape_cast %115 : vector<16xf32> to vector<16x1xf32>
    %cst_23 = arith.constant 3.200000e+01 : f32
    %117 = vector.broadcast %cst_23 : f32 to vector<16x1xf32>
    %118 = arith.divf %116, %117 : vector<16x1xf32>
    %119 = vector.broadcast %111 : vector<16x1xf32> to vector<16x32xf32>
    %120 = arith.subf %105, %119 : vector<16x32xf32>
    %cst_24 = arith.constant 9.99999974E-6 : f32
    %121 = vector.broadcast %cst_24 : f32 to vector<16x1xf32>
    %122 = arith.addf %118, %121 : vector<16x1xf32>
    %123 = math.rsqrt %122 : vector<16x1xf32>
    %124 = vector.broadcast %123 : vector<16x1xf32> to vector<16x32xf32>
    %125 = arith.mulf %120, %124 : vector<16x32xf32>
    %126 = vector.broadcast %106 : vector<1x32xf32> to vector<16x32xf32>
    %127 = arith.mulf %125, %126 : vector<16x32xf32>
    %128 = vector.broadcast %107 : vector<1x32xf32> to vector<16x32xf32>
    %129 = arith.addf %127, %128 : vector<16x32xf32>
    %130 = arith.truncf %129 : vector<16x32xf32> to vector<16x32xbf16>
    %c0_25 = arith.constant 0 : index
    %c0_26 = arith.constant 0 : index
    %131 = vector.load %arg8[%c0_25, %c0_26] : memref<32x64xbf16, #tpu.memory_space<vmem>>, vector<32x64xbf16>
    %cst_27 = arith.constant dense<0.000000e+00> : vector<16x64xf32>
    %132 = tpu.matmul %130, %131, %cst_27 {dimension_numbers = #tpu.dot_dimension_numbers<[1], [0], [0], [1], [0, 0, 1, 1], [], []>} : vector<16x32xbf16>, vector<32x64xbf16>, vector<16x64xf32> -> vector<16x64xf32>
    %c0_28 = arith.constant 0 : index
    %c0_29 = arith.constant 0 : index
    %133 = vector.load %arg9[%c0_28, %c0_29] : memref<1x64xf32, #tpu.memory_space<vmem>>, vector<1x64xf32>
    %134 = vector.broadcast %133 : vector<1x64xf32> to vector<16x64xf32>
    %135 = arith.addf %132, %134 : vector<16x64xf32>
    %cst_30 = arith.constant 0.000000e+00 : f32
    %136 = vector.broadcast %cst_30 : f32 to vector<16x64xf32>
    %137 = arith.maximumf %135, %136 : vector<16x64xf32>
    %138 = arith.truncf %137 : vector<16x64xf32> to vector<16x64xbf16>
    %c0_31 = arith.constant 0 : index
    %c0_32 = arith.constant 0 : index
    %139 = vector.load %arg10[%c0_31, %c0_32] : memref<64x32xbf16, #tpu.memory_space<vmem>>, vector<64x32xbf16>
    %cst_33 = arith.constant dense<0.000000e+00> : vector<16x32xf32>
    %140 = tpu.matmul %138, %139, %cst_33 {dimension_numbers = #tpu.dot_dimension_numbers<[1], [0], [0], [1], [0, 0, 1, 1], [], []>} : vector<16x64xbf16>, vector<64x32xbf16>, vector<16x32xf32> -> vector<16x32xf32>
    %c0_34 = arith.constant 0 : index
    %c0_35 = arith.constant 0 : index
    %141 = vector.load %arg11[%c0_34, %c0_35] : memref<1x32xf32, #tpu.memory_space<vmem>>, vector<1x32xf32>
    %142 = vector.broadcast %141 : vector<1x32xf32> to vector<16x32xf32>
    %143 = arith.addf %140, %142 : vector<16x32xf32>
    %144 = arith.addf %129, %143 : vector<16x32xf32>
    %c0_36 = arith.constant 0 : index
    %c0_37 = arith.constant 0 : index
    %145 = vector.load %arg12[%c0_36, %c0_37] : memref<1x32xf32, #tpu.memory_space<vmem>>, vector<1x32xf32>
    %c0_38 = arith.constant 0 : index
    %c0_39 = arith.constant 0 : index
    %146 = vector.load %arg13[%c0_38, %c0_39] : memref<1x32xf32, #tpu.memory_space<vmem>>, vector<1x32xf32>
    %cst_40 = arith.constant dense<0.000000e+00> : vector<16xf32>
    %147 = vector.multi_reduction <add>, %144, %cst_40 [1] : vector<16x32xf32> to vector<16xf32>
    %148 = vector.shape_cast %147 : vector<16xf32> to vector<16x1xf32>
    %cst_41 = arith.constant 3.200000e+01 : f32
    %149 = vector.broadcast %cst_41 : f32 to vector<16x1xf32>
    %150 = arith.divf %148, %149 : vector<16x1xf32>
    %151 = vector.broadcast %150 : vector<16x1xf32> to vector<16x32xf32>
    %152 = arith.subf %144, %151 : vector<16x32xf32>
    %153 = arith.mulf %152, %152 : vector<16x32xf32>
    %cst_42 = arith.constant dense<0.000000e+00> : vector<16xf32>
    %154 = vector.multi_reduction <add>, %153, %cst_42 [1] : vector<16x32xf32> to vector<16xf32>
    %155 = vector.shape_cast %154 : vector<16xf32> to vector<16x1xf32>
    %cst_43 = arith.constant 3.200000e+01 : f32
    %156 = vector.broadcast %cst_43 : f32 to vector<16x1xf32>
    %157 = arith.divf %155, %156 : vector<16x1xf32>
    %158 = vector.broadcast %150 : vector<16x1xf32> to vector<16x32xf32>
    %159 = arith.subf %144, %158 : vector<16x32xf32>
    %cst_44 = arith.constant 9.99999974E-6 : f32
    %160 = vector.broadcast %cst_44 : f32 to vector<16x1xf32>
    %161 = arith.addf %157, %160 : vector<16x1xf32>
    %162 = math.rsqrt %161 : vector<16x1xf32>
    %163 = vector.broadcast %162 : vector<16x1xf32> to vector<16x32xf32>
    %164 = arith.mulf %159, %163 : vector<16x32xf32>
    %165 = vector.broadcast %145 : vector<1x32xf32> to vector<16x32xf32>
    %166 = arith.mulf %164, %165 : vector<16x32xf32>
    %167 = vector.broadcast %146 : vector<1x32xf32> to vector<16x32xf32>
    %168 = arith.addf %166, %167 : vector<16x32xf32>
    %169 = vector.shape_cast %168 : vector<16x32xf32> to vector<2x8x32xf32>
    %c0_45 = arith.constant 0 : index
    %c0_46 = arith.constant 0 : index
    %c0_47 = arith.constant 0 : index
    %170 = vector.load %arg14[%c0_45, %c0_46, %c0_47] : memref<2x8x32xf32, #tpu.memory_space<vmem>>, vector<2x8x32xf32>
    tpu.vector_store %arg14[%c0_45, %c0_46, %c0_47], %169 {strides = array<i32>} : memref<2x8x32xf32, #tpu.memory_space<vmem>>, vector<2x8x32xf32>,
    return
  }
  func.func @transform_0(%arg0: i32) -> (i32, i32, i32) {
    %c0_i32 = arith.constant 0 : i32
    %c0_i32_0 = arith.constant 0 : i32
    %c0_i32_1 = arith.constant 0 : i32
    return %arg0, %c0_i32, %c0_i32_0 : i32, i32, i32
  }
  func.func @transform_1(%arg0: i32) -> (i32, i32) {
    %c0_i32 = arith.constant 0 : i32
    %c0_i32_0 = arith.constant 0 : i32
    %c0_i32_1 = arith.constant 0 : i32
    return %c0_i32, %c0_i32_0 : i32, i32
  }
  func.func @transform_2(%arg0: i32) -> (i32, i32) {
    %c0_i32 = arith.constant 0 : i32
    %c0_i32_0 = arith.constant 0 : i32
    %c0_i32_1 = arith.constant 0 : i32
    return %c0_i32, %c0_i32_0 : i32, i32
  }
  func.func @transform_3(%arg0: i32) -> (i32, i32) {
    %c0_i32 = arith.constant 0 : i32
    %c0_i32_0 = arith.constant 0 : i32
    %c0_i32_1 = arith.constant 0 : i32
    return %c0_i32, %c0_i32_0 : i32, i32
  }
  func.func @transform_4(%arg0: i32) -> (i32, i32) {
    %c0_i32 = arith.constant 0 : i32
    %c0_i32_0 = arith.constant 0 : i32
    %c0_i32_1 = arith.constant 0 : i32
    return %c0_i32, %c0_i32_0 : i32, i32
  }
  func.func @transform_5(%arg0: i32) -> (i32, i32) {
    %c0_i32 = arith.constant 0 : i32
    %c0_i32_0 = arith.constant 0 : i32
    %c0_i32_1 = arith.constant 0 : i32
    return %c0_i32, %c0_i32_0 : i32, i32
  }
  func.func @transform_6(%arg0: i32) -> (i32, i32) {
    %c0_i32 = arith.constant 0 : i32
    %c0_i32_0 = arith.constant 0 : i32
    %c0_i32_1 = arith.constant 0 : i32
    return %c0_i32, %c0_i32_0 : i32, i32
  }
  func.func @transform_7(%arg0: i32) -> (i32, i32) {
    %c0_i32 = arith.constant 0 : i32
    %c0_i32_0 = arith.constant 0 : i32
    %c0_i32_1 = arith.constant 0 : i32
    return %c0_i32, %c0_i32_0 : i32, i32
  }
  func.func @transform_8(%arg0: i32) -> (i32, i32) {
    %c0_i32 = arith.constant 0 : i32
    %c0_i32_0 = arith.constant 0 : i32
    %c0_i32_1 = arith.constant 0 : i32
    return %c0_i32, %c0_i32_0 : i32, i32
  }
  func.func @transform_9(%arg0: i32) -> (i32, i32) {
    %c0_i32 = arith.constant 0 : i32
    %c0_i32_0 = arith.constant 0 : i32
    %c0_i32_1 = arith.constant 0 : i32
    return %c0_i32, %c0_i32_0 : i32, i32
  }
  func.func @transform_10(%arg0: i32) -> (i32, i32) {
    %c0_i32 = arith.constant 0 : i32
    %c0_i32_0 = arith.constant 0 : i32
    %c0_i32_1 = arith.constant 0 : i32
    return %c0_i32, %c0_i32_0 : i32, i32
  }
  func.func @transform_11(%arg0: i32) -> (i32, i32) {
    %c0_i32 = arith.constant 0 : i32
    %c0_i32_0 = arith.constant 0 : i32
    %c0_i32_1 = arith.constant 0 : i32
    return %c0_i32, %c0_i32_0 : i32, i32
  }
  func.func @transform_12(%arg0: i32) -> (i32, i32) {
    %c0_i32 = arith.constant 0 : i32
    %c0_i32_0 = arith.constant 0 : i32
    %c0_i32_1 = arith.constant 0 : i32
    return %c0_i32, %c0_i32_0 : i32, i32
  }
  func.func @transform_13(%arg0: i32) -> (i32, i32, i32) {
    %c0_i32 = arith.constant 0 : i32
    %c0_i32_0 = arith.constant 0 : i32
    %c0_i32_1 = arith.constant 0 : i32
    return %arg0, %c0_i32, %c0_i32_0 : i32, i32, i32
  }
}

</mosaic_0001>

<llo_original>
// kernel: tpu_custom_call.1
$region0: #{tpu_custom_call.1}
  #allocation0 [shape = 'u32[]', space=smem, size = 0x4, offset = 0x4, fixed_abs, tag = 'smem constant byte address 0x4 - core index']
  #allocation1 [shape = 'u32[72,128]{1,0:T(1,128)}', space=vmem, size = 0x9000, scoped, tag = 'internal scratch']
  %s0 = inlined_call_operand.vmem [shape: f32[2,8,32], index: 0, kind: input, shape index: {}]
  %s1 = inlined_call_operand.vmem [shape: bf16[32,96], index: 1, kind: input, shape index: {}]
  %s2 = inlined_call_operand.vmem [shape: f32[1,96], index: 2, kind: input, shape index: {}]
  %s3 = inlined_call_operand.vmem [shape: bf16[32,32], index: 3, kind: input, shape index: {}]
  %s4 = inlined_call_operand.vmem [shape: f32[1,32], index: 4, kind: input, shape index: {}]
  %s5 = inlined_call_operand.vmem [shape: f32[1,32], index: 5, kind: input, shape index: {}]
  %s6 = inlined_call_operand.vmem [shape: f32[1,32], index: 6, kind: input, shape index: {}]
  %s7 = inlined_call_operand.hbm [shape: bf16[32,64], index: 7, kind: input, shape index: {}]
  %s8 = inlined_call_operand.vmem [shape: f32[1,64], index: 8, kind: input, shape index: {}]
  %s9 = inlined_call_operand.vmem [shape: bf16[64,32], index: 9, kind: input, shape index: {}]
  %s10 = inlined_call_operand.vmem [shape: f32[1,32], index: 10, kind: input, shape index: {}]
  %s11 = inlined_call_operand.vmem [shape: f32[1,32], index: 11, kind: input, shape index: {}]
  %s12 = inlined_call_operand.vmem [shape: f32[1,32], index: 12, kind: input, shape index: {}]
  %s13 = inlined_call_operand.hbm [shape: f32[2,8,32], index: 13, kind: output, shape index: {}]
  %s14 = sld [smem:[#allocation0]]
  $region66: #{tpu_custom_call.1} parent=0
    _
  %s16 = ssub.s32 1, %s14
  %s17 = scalar_select 0, %s16, %s14
  $region1: #{tpu_custom_call.1} parent=0
    #allocation2 [shape = 'u8[8192]{0}', space=vmem, size = 0x2000, scoped, tag = 'input window, operand 7, single buffered']
    #allocation3 [shape = 's32[1]{0}', space=sflag, size = 0x4, scoped, tag = 'scoped memory for tpu_custom_call.1']
    #allocation4 [shape = 's32[1]{0}', space=sflag, size = 0x4, scoped, tag = 'scoped memory for tpu_custom_call.1']
    #allocation5 [shape = 'u8[8192]{0}', space=vmem, size = 0x2000, scoped, tag = 'output window, operand 0, single buffered']
    %18 = vsyncpa [#allocation3], 0
    %19 = vsyncpa [#allocation4], 0
    // Predicated region
    $region2: #{tpu_custom_call.1} parent=1 // pred_check
      _
    $region3: #{tpu_custom_call.1} parent=1 // pred_check_branch
      %21 = sbr.rel (0) target = $region5
    $region4: #{tpu_custom_call.1} parent=1 // pred_region
      _
    $region5: #{tpu_custom_call.1} parent=1 // pred_fallthru
      _
    // Predicated region
    $region6: #{tpu_custom_call.1} parent=1 // pred_check
      _
    $region7: #{tpu_custom_call.1} parent=1 // pred_check_branch
      %23 = sbr.rel (0) target = $region9
    $region8: #{tpu_custom_call.1} parent=1 // pred_region
      _
    $region9: #{tpu_custom_call.1} parent=1 // pred_fallthru
      _
    // Predicated region
    $region10: #{tpu_custom_call.1} parent=1 // pred_check
      _
    $region11: #{tpu_custom_call.1} parent=1 // pred_check_branch
      %25 = sbr.rel (0) target = $region13
    $region12: #{tpu_custom_call.1} parent=1 // pred_region
      _
    $region13: #{tpu_custom_call.1} parent=1 // pred_fallthru
      _
    // Predicated region
    $region14: #{tpu_custom_call.1} parent=1 // pred_check
      _
    $region15: #{tpu_custom_call.1} parent=1 // pred_check_branch
      %27 = sbr.rel (0) target = $region17
    $region16: #{tpu_custom_call.1} parent=1 // pred_region
      _
    $region17: #{tpu_custom_call.1} parent=1 // pred_fallthru
      _
    // Predicated region
    $region18: #{tpu_custom_call.1} parent=1 // pred_check
      _
    $region19: #{tpu_custom_call.1} parent=1 // pred_check_branch
      %29 = sbr.rel (0) target = $region21
    $region20: #{tpu_custom_call.1} parent=1 // pred_region
      _
    $region21: #{tpu_custom_call.1} parent=1 // pred_fallthru
      _
    // Predicated region
    $region22: #{tpu_custom_call.1} parent=1 // pred_check
      _
    $region23: #{tpu_custom_call.1} parent=1 // pred_check_branch
      %31 = sbr.rel (0) target = $region25
    $region24: #{tpu_custom_call.1} parent=1 // pred_region
      _
    $region25: #{tpu_custom_call.1} parent=1 // pred_fallthru
      _
    // Predicated region
    $region26: #{tpu_custom_call.1} parent=1 // pred_check
      _
    $region27: #{tpu_custom_call.1} parent=1 // pred_check_branch
      %33 = sbr.rel (0) target = $region29
    $region28: #{tpu_custom_call.1} parent=1 // pred_region
      _
    $region29: #{tpu_custom_call.1} parent=1 // pred_fallthru
      _
    // Predicated region
    $region30: #{tpu_custom_call.1} parent=1 // pred_check
      _
    $region31: #{tpu_custom_call.1} parent=1 // pred_check_branch
      %35 = sbr.rel (0) target = $region33
    $region32: #{tpu_custom_call.1} parent=1 // pred_region
      %37 = vsyncadd [#allocation3], 0
      %s38 = sshll.u32 %s7, 4
      %s39 = int_to_ptr.hbm [resolvable:$true] %s38
      %s40 = sshll.u32 [#allocation2], 4
      %s41 = int_to_ptr.vmem [resolvable:$true] %s40
      %46 = dma.hbm_to_vmem [thread:$0]  %s39, 256, %s41, [#allocation3], 64, 64, 4
    $region33: #{tpu_custom_call.1} parent=1 // pred_fallthru
      _
    // Predicated region
    $region34: #{tpu_custom_call.1} parent=1 // pred_check
      _
    $region35: #{tpu_custom_call.1} parent=1 // pred_check_branch
      %48 = sbr.rel (0) target = $region37
    $region36: #{tpu_custom_call.1} parent=1 // pred_region
      _
    $region37: #{tpu_custom_call.1} parent=1 // pred_fallthru
      _
    // Predicated region
    $region38: #{tpu_custom_call.1} parent=1 // pred_check
      _
    $region39: #{tpu_custom_call.1} parent=1 // pred_check_branch
      %50 = sbr.rel (0) target = $region41
    $region40: #{tpu_custom_call.1} parent=1 // pred_region
      _
    $region41: #{tpu_custom_call.1} parent=1 // pred_fallthru
      _
    // Predicated region
    $region42: #{tpu_custom_call.1} parent=1 // pred_check
      _
    $region43: #{tpu_custom_call.1} parent=1 // pred_check_branch
      %52 = sbr.rel (0) target = $region45
    $region44: #{tpu_custom_call.1} parent=1 // pred_region
      _
    $region45: #{tpu_custom_call.1} parent=1 // pred_fallthru
      _
    // Predicated region
    $region46: #{tpu_custom_call.1} parent=1 // pred_check
      _
    $region47: #{tpu_custom_call.1} parent=1 // pred_check_branch
      %54 = sbr.rel (0) target = $region49
    $region48: #{tpu_custom_call.1} parent=1 // pred_region
      _
    $region49: #{tpu_custom_call.1} parent=1 // pred_fallthru
      _
    // Predicated region
    $region50: #{tpu_custom_call.1} parent=1 // pred_check
      _
    $region51: #{tpu_custom_call.1} parent=1 // pred_check_branch
      %56 = sbr.rel (0) target = $region53
    $region52: #{tpu_custom_call.1} parent=1 // pred_region
      _
    $region53: #{tpu_custom_call.1} parent=1 // pred_fallthru
      _
    // Predicated region
    $region54: #{tpu_custom_call.1} parent=1 // pred_check
      _
    $region55: #{tpu_custom_call.1} parent=1 // pred_check_branch
      %58 = sbr.rel (0) target = $region57
    $region56: #{tpu_custom_call.1} parent=1 // pred_region
      %60 = dma.done [#allocation3], 256
    $region57: #{tpu_custom_call.1} parent=1 // pred_fallthru
      _
    %v62 = vld [vmem:[%s0] sm:$0xff]
    %v63 = vld [vmem:[%s0 + $0x8] sm:$0xff]
    %v64 = vpack.c.bf16 %v63, %v62
    %v65 = vld [vmem:[%s1] sm:$0xf]
    %v66 = vld [vmem:[%s1 + $0x4] sm:$0xf]
    %v67 = vld [vmem:[%s1 + $0x8] sm:$0xf]
    %v68 = vld [vmem:[%s1 + $0xc] sm:$0xf]
    %v69 = vld [vmem:[%s2] sm:$0x1]
    %v71 = vperm.slane %v69, 0
    %v77 = vunpack.c.l.b16 %v65
    %v78 = vunpack.c.l.b16 %v66
    %v79 = vunpack.c.l.b16 %v67
    %v80 = vunpack.c.l.b16 %v68
    %v81 = vpack.c.b16 %v78, %v77
    %v82 = vpack.c.b16 %v80, %v79
    %vm85 = vcmask 261120
    %v87 = vsel %vm85, %v64, 0
    %89 = vmatpush.bf16.msra.mxu0 0
    %90 = vmatpush.bf16.msra.mxu0 0
    %91 = vmatpush.bf16.msra.mxu0 0
    %92 = vmatpush.bf16.msra.mxu0 0
    %93 = vmatpush.bf16.msra.mxu0 0
    %94 = vmatpush.bf16.msra.mxu0 0
    %95 = vmatpush.bf16.msra.mxu0 %v82
    %96 = vmatpush.bf16.msra.mxu0 %v81
    %97 = vmatmul.bf16.gmra.mxu0 %v87
    %v98 = vpop.f32.mrf.mxu0
    %v99 = vadd.f32 %v71, %v98
    %v100 = vpop.f32.mrf.mxu0
    %v101 = vadd.f32 %v71, %v100
    %102 = vdwg.mxu0
    %104 = vrot.lane.b32.xlu0 %v99, 120
    %v105 = vpop.permute.xlu0 %104
    %107 = vrot.lane.b32.xlu0 %v99, 112
    %v108 = vpop.permute.xlu0 %107
    %110 = vrot.lane.b32.xlu0 %v99, 104
    %v111 = vpop.permute.xlu0 %110
    %114 = vrot.lane.b32.xlu0 %v101, 120
    %v115 = vpop.permute.xlu0 %114
    %117 = vrot.lane.b32.xlu0 %v101, 112
    %v118 = vpop.permute.xlu0 %117
    %120 = vrot.lane.b32.xlu0 %v101, 104
    %v121 = vpop.permute.xlu0 %120
    %v123 = vpack.c.bf16 %v99, %v99
    %v124 = vpack.c.bf16 %v105, %v105
    %v125 = vpack.c.bf16 %v108, %v108
    %v126 = vpack.c.bf16 %v111, %v111
    %v127 = vpack.c.bf16 %v101, %v101
    %v128 = vpack.c.bf16 %v115, %v115
    %v129 = vpack.c.bf16 %v118, %v118
    %v130 = vpack.c.bf16 %v121, %v121
    %v132 = vunpack.c.l.b16 %v123
    %v133 = vpack.c.b16 %v132, %v132
    %134 = vrot.lane.b32.xlu0 %v133, 96
    %v135 = vpop.permute.xlu0 %134
    %vm136 = vcmask 64512
    %v138 = vsel %vm136, %v123, 0
    %v141 = vsel %vm136, %v135, 0
    %143 = vmatpush.bf16.xpose.msra.mxu0 0
    %144 = vmatpush.bf16.xpose.msra.mxu0 0
    %145 = vmatpush.bf16.xpose.msra.mxu0 0
    %146 = vmatpush.bf16.xpose.msra.mxu0 0
    %147 = vmatpush.bf16.xpose.msra.mxu0 0
    %148 = vmatpush.bf16.xpose.msra.mxu0 0
    %149 = vmatpush.bf16.xpose.msra.mxu0 0
    %150 = vmatpush.bf16.xpose.msra.mxu0 %v141
    %151 = vmatmul.bf16.gmra.mxu0 %v138
    %v152 = vpop.f32.mrf.mxu0
    %v153 = vadd.f32 0.0, %v152
    %v154 = vpop.f32.mrf.mxu0
    %155 = vdwg.mxu0
    %v157 = vunpack.c.l.b16 %v124
    %v158 = vpack.c.b16 %v157, %v157
    %159 = vrot.lane.b32.xlu0 %v158, 96
    %v160 = vpop.permute.xlu0 %159
    %v162 = vsel %vm136, %v124, 0
    %v165 = vsel %vm136, %v160, 0
    %167 = vmatpush.bf16.xpose.msra.mxu0 0
    %168 = vmatpush.bf16.xpose.msra.mxu0 0
    %169 = vmatpush.bf16.xpose.msra.mxu0 0
    %170 = vmatpush.bf16.xpose.msra.mxu0 0
    %171 = vmatpush.bf16.xpose.msra.mxu0 0
    %172 = vmatpush.bf16.xpose.msra.mxu0 0
    %173 = vmatpush.bf16.xpose.msra.mxu0 0
    %174 = vmatpush.bf16.xpose.msra.mxu0 %v165
    %175 = vmatmul.bf16.gmra.mxu0 %v162
    %v176 = vpop.f32.mrf.mxu0
    %v177 = vadd.f32 0.0, %v176
    %v178 = vpop.f32.mrf.mxu0
    %179 = vdwg.mxu0
    %v181 = vunpack.c.l.b16 %v125
    %v182 = vpack.c.b16 %v181, %v181
    %183 = vrot.lane.b32.xlu0 %v182, 96
    %v184 = vpop.permute.xlu0 %183
    %v186 = vsel %vm136, %v125, 0
    %v189 = vsel %vm136, %v184, 0
    %191 = vmatpush.bf16.xpose.msra.mxu0 0
    %192 = vmatpush.bf16.xpose.msra.mxu0 0
    %193 = vmatpush.bf16.xpose.msra.mxu0 0
    %194 = vmatpush.bf16.xpose.msra.mxu0 0
    %195 = vmatpush.bf16.xpose.msra.mxu0 0
    %196 = vmatpush.bf16.xpose.msra.mxu0 0
    %197 = vmatpush.bf16.xpose.msra.mxu0 0
    %198 = vmatpush.bf16.xpose.msra.mxu0 %v189
    %199 = vmatmul.bf16.gmra.mxu0 %v186
    %v200 = vpop.f32.mrf.mxu0
    %v201 = vadd.f32 0.0, %v200
    %v202 = vpop.f32.mrf.mxu0
    %203 = vdwg.mxu0
    %v205 = vunpack.c.l.b16 %v126
    %v206 = vpack.c.b16 %v205, %v205
    %207 = vrot.lane.b32.xlu0 %v206, 96
    %v208 = vpop.permute.xlu0 %207
    %v210 = vsel %vm136, %v126, 0
    %v213 = vsel %vm136, %v208, 0
    %215 = vmatpush.bf16.xpose.msra.mxu0 0
    %216 = vmatpush.bf16.xpose.msra.mxu0 0
    %217 = vmatpush.bf16.xpose.msra.mxu0 0
    %218 = vmatpush.bf16.xpose.msra.mxu0 0
    %219 = vmatpush.bf16.xpose.msra.mxu0 0
    %220 = vmatpush.bf16.xpose.msra.mxu0 0
    %221 = vmatpush.bf16.xpose.msra.mxu0 0
    %222 = vmatpush.bf16.xpose.msra.mxu0 %v213
    %223 = vmatmul.bf16.gmra.mxu0 %v210
    %v224 = vpop.f32.mrf.mxu0
    %v225 = vadd.f32 0.0, %v224
    %v226 = vpop.f32.mrf.mxu0
    %227 = vdwg.mxu0
    %v229 = vunpack.c.l.b16 %v127
    %v230 = vpack.c.b16 %v229, %v229
    %231 = vrot.lane.b32.xlu0 %v230, 96
    %v232 = vpop.permute.xlu0 %231
    %v234 = vsel %vm136, %v127, 0
    %v237 = vsel %vm136, %v232, 0
    %239 = vmatpush.bf16.xpose.msra.mxu0 0
    %240 = vmatpush.bf16.xpose.msra.mxu0 0
    %241 = vmatpush.bf16.xpose.msra.mxu0 0
    %242 = vmatpush.bf16.xpose.msra.mxu0 0
    %243 = vmatpush.bf16.xpose.msra.mxu0 0
    %244 = vmatpush.bf16.xpose.msra.mxu0 0
    %245 = vmatpush.bf16.xpose.msra.mxu0 0
    %246 = vmatpush.bf16.xpose.msra.mxu0 %v237
    %247 = vmatmul.bf16.gmra.mxu0 %v234
    %v248 = vpop.f32.mrf.mxu0
    %v249 = vadd.f32 0.0, %v248
    %v250 = vpop.f32.mrf.mxu0
    %251 = vdwg.mxu0
    %v253 = vunpack.c.l.b16 %v128
    %v254 = vpack.c.b16 %v253, %v253
    %255 = vrot.lane.b32.xlu0 %v254, 96
    %v256 = vpop.permute.xlu0 %255
    %v258 = vsel %vm136, %v128, 0
    %v261 = vsel %vm136, %v256, 0
    %263 = vmatpush.bf16.xpose.msra.mxu0 0
    %264 = vmatpush.bf16.xpose.msra.mxu0 0
    %265 = vmatpush.bf16.xpose.msra.mxu0 0
    %266 = vmatpush.bf16.xpose.msra.mxu0 0
    %267 = vmatpush.bf16.xpose.msra.mxu0 0
    %268 = vmatpush.bf16.xpose.msra.mxu0 0
    %269 = vmatpush.bf16.xpose.msra.mxu0 0
    %270 = vmatpush.bf16.xpose.msra.mxu0 %v261
    %271 = vmatmul.bf16.gmra.mxu0 %v258
    %v272 = vpop.f32.mrf.mxu0
    %v273 = vadd.f32 0.0, %v272
    %v274 = vpop.f32.mrf.mxu0
    %275 = vdwg.mxu0
    %v277 = vunpack.c.l.b16 %v129
    %v278 = vpack.c.b16 %v277, %v277
    %279 = vrot.lane.b32.xlu0 %v278, 96
    %v280 = vpop.permute.xlu0 %279
    %v282 = vsel %vm136, %v129, 0
    %v285 = vsel %vm136, %v280, 0
    %287 = vmatpush.bf16.xpose.msra.mxu0 0
    %288 = vmatpush.bf16.xpose.msra.mxu0 0
    %289 = vmatpush.bf16.xpose.msra.mxu0 0
    %290 = vmatpush.bf16.xpose.msra.mxu0 0
    %291 = vmatpush.bf16.xpose.msra.mxu0 0
    %292 = vmatpush.bf16.xpose.msra.mxu0 0
    %293 = vmatpush.bf16.xpose.msra.mxu0 0
    %294 = vmatpush.bf16.xpose.msra.mxu0 %v285
    %295 = vmatmul.bf16.gmra.mxu0 %v282
    %v296 = vpop.f32.mrf.mxu0
    %v297 = vadd.f32 0.0, %v296
    %v298 = vpop.f32.mrf.mxu0
    %299 = vdwg.mxu0
    %v301 = vunpack.c.l.b16 %v130
    %v302 = vpack.c.b16 %v301, %v301
    %303 = vrot.lane.b32.xlu0 %v302, 96
    %v304 = vpop.permute.xlu0 %303
    %v306 = vsel %vm136, %v130, 0
    %v309 = vsel %vm136, %v304, 0
    %311 = vmatpush.bf16.xpose.msra.mxu0 0
    %312 = vmatpush.bf16.xpose.msra.mxu0 0
    %313 = vmatpush.bf16.xpose.msra.mxu0 0
    %314 = vmatpush.bf16.xpose.msra.mxu0 0
    %315 = vmatpush.bf16.xpose.msra.mxu0 0
    %316 = vmatpush.bf16.xpose.msra.mxu0 0
    %317 = vmatpush.bf16.xpose.msra.mxu0 0
    %318 = vmatpush.bf16.xpose.msra.mxu0 %v309
    %319 = vmatmul.bf16.gmra.mxu0 %v306
    %v320 = vpop.f32.mrf.mxu0
    %v321 = vadd.f32 0.0, %v320
    %v322 = vpop.f32.mrf.mxu0
    %323 = vdwg.mxu0
    %v324 = vmul.f32 %v153, 0.35355338
    %v325 = vmul.f32 %v177, 0.35355338
    %v326 = vmul.f32 %v201, 0.35355338
    %v327 = vmul.f32 %v225, 0.35355338
    %v328 = vmul.f32 %v249, 0.35355338
    %v329 = vmul.f32 %v273, 0.35355338
    %v330 = vmul.f32 %v297, 0.35355338
    %v331 = vmul.f32 %v321, 0.35355338
    %v332 = vsel %vm136, %v324, -inf
    %333 = vmax.xlane.f32.xlu0 %v332
    %v334 = vpop.xlane.xlu0 %333
    %v335 = vsel %vm136, %v325, -inf
    %336 = vmax.xlane.f32.xlu0 %v335
    %v337 = vpop.xlane.xlu0 %336
    %v338 = vsel %vm136, %v326, -inf
    %339 = vmax.xlane.f32.xlu0 %v338
    %v340 = vpop.xlane.xlu0 %339
    %v341 = vsel %vm136, %v327, -inf
    %342 = vmax.xlane.f32.xlu0 %v341
    %v343 = vpop.xlane.xlu0 %342
    %v344 = vsel %vm136, %v328, -inf
    %345 = vmax.xlane.f32.xlu0 %v344
    %v346 = vpop.xlane.xlu0 %345
    %v347 = vsel %vm136, %v329, -inf
    %348 = vmax.xlane.f32.xlu0 %v347
    %v349 = vpop.xlane.xlu0 %348
    %v350 = vsel %vm136, %v330, -inf
    %351 = vmax.xlane.f32.xlu0 %v350
    %v352 = vpop.xlane.xlu0 %351
    %v353 = vsel %vm136, %v331, -inf
    %354 = vmax.xlane.f32.xlu0 %v353
    %v355 = vpop.xlane.xlu0 %354
    %v356 = vsub.f32 %v324, %v334
    %v357 = vsub.f32 %v325, %v337
    %v358 = vsub.f32 %v326, %v340
    %v359 = vsub.f32 %v327, %v343
    %v360 = vsub.f32 %v328, %v346
    %v361 = vsub.f32 %v329, %v349
    %v362 = vsub.f32 %v330, %v352
    %v363 = vsub.f32 %v331, %v355
    %v364 = vmul.f32 %v356, 1.442695
    %v365 = vpow.pop %v364
    %v366 = vmul.f32 %v357, 1.442695
    %v367 = vpow.pop %v366
    %v368 = vmul.f32 %v358, 1.442695
    %v369 = vpow.pop %v368
    %v370 = vmul.f32 %v359, 1.442695
    %v371 = vpow.pop %v370
    %v372 = vmul.f32 %v360, 1.442695
    %v373 = vpow.pop %v372
    %v374 = vmul.f32 %v361, 1.442695
    %v375 = vpow.pop %v374
    %v376 = vmul.f32 %v362, 1.442695
    %v377 = vpow.pop %v376
    %v378 = vmul.f32 %v363, 1.442695
    %v379 = vpow.pop %v378
    %v380 = vsel %vm136, %v365, 0.0
    %381 = vadd.xlane.f32.xlu0 %v380
    %v382 = vpop.xlane.xlu0 %381
    %v383 = vsel %vm136, %v367, 0.0
    %384 = vadd.xlane.f32.xlu0 %v383
    %v385 = vpop.xlane.xlu0 %384
    %v386 = vsel %vm136, %v369, 0.0
    %387 = vadd.xlane.f32.xlu0 %v386
    %v388 = vpop.xlane.xlu0 %387
    %v389 = vsel %vm136, %v371, 0.0
    %390 = vadd.xlane.f32.xlu0 %v389
    %v391 = vpop.xlane.xlu0 %390
    %v392 = vsel %vm136, %v373, 0.0
    %393 = vadd.xlane.f32.xlu0 %v392
    %v394 = vpop.xlane.xlu0 %393
    %v395 = vsel %vm136, %v375, 0.0
    %396 = vadd.xlane.f32.xlu0 %v395
    %v397 = vpop.xlane.xlu0 %396
    %v398 = vsel %vm136, %v377, 0.0
    %399 = vadd.xlane.f32.xlu0 %v398
    %v400 = vpop.xlane.xlu0 %399
    %v401 = vsel %vm136, %v379, 0.0
    %402 = vadd.xlane.f32.xlu0 %v401
    %v403 = vpop.xlane.xlu0 %402
    %v404 = vrcp.pop %v382
    %v405 = vrcp.pop %v385
    %v406 = vrcp.pop %v388
    %v407 = vrcp.pop %v391
    %v408 = vrcp.pop %v394
    %v409 = vrcp.pop %v397
    %v410 = vrcp.pop %v400
    %v411 = vrcp.pop %v403
    %v412 = vmul.f32 %v365, %v404
    %v413 = vmul.f32 %v367, %v405
    %v414 = vmul.f32 %v369, %v406
    %v415 = vmul.f32 %v371, %v407
    %v416 = vmul.f32 %v373, %v408
    %v417 = vmul.f32 %v375, %v409
    %v418 = vmul.f32 %v377, %v410
    %v419 = vmul.f32 %v379, %v411
    %v420 = vpack.c.bf16 %v412, %v412
    %v421 = vpack.c.bf16 %v413, %v413
    %v422 = vpack.c.bf16 %v414, %v414
    %v423 = vpack.c.bf16 %v415, %v415
    %v424 = vpack.c.bf16 %v416, %v416
    %v425 = vpack.c.bf16 %v417, %v417
    %v426 = vpack.c.bf16 %v418, %v418
    %v427 = vpack.c.bf16 %v419, %v419
    %428 = vrot.lane.b32.xlu0 %v133, 64
    %v429 = vpop.permute.xlu0 %428
    %v431 = vsel %vm136, %v420, 0
    %vm433 = vcmask 1043456
    %v435 = vsel %vm433, %v429, 0
    %437 = vmatpush.bf16.msra.mxu0 0
    %438 = vmatpush.bf16.msra.mxu0 0
    %439 = vmatpush.bf16.msra.mxu0 0
    %440 = vmatpush.bf16.msra.mxu0 0
    %441 = vmatpush.bf16.msra.mxu0 0
    %442 = vmatpush.bf16.msra.mxu0 0
    %443 = vmatpush.bf16.msra.mxu0 0
    %444 = vmatpush.bf16.msra.mxu0 %v435
    %445 = vmatmul.bf16.gmra.mxu0 %v431
    %v446 = vpop.f32.mrf.mxu0
    %v447 = vadd.f32 0.0, %v446
    %v448 = vpop.f32.mrf.mxu0
    %449 = vdwg.mxu0
    %450 = vrot.lane.b32.xlu0 %v158, 64
    %v451 = vpop.permute.xlu0 %450
    %v453 = vsel %vm136, %v421, 0
    %v456 = vsel %vm433, %v451, 0
    %458 = vmatpush.bf16.msra.mxu0 0
    %459 = vmatpush.bf16.msra.mxu0 0
    %460 = vmatpush.bf16.msra.mxu0 0
    %461 = vmatpush.bf16.msra.mxu0 0
    %462 = vmatpush.bf16.msra.mxu0 0
    %463 = vmatpush.bf16.msra.mxu0 0
    %464 = vmatpush.bf16.msra.mxu0 0
    %465 = vmatpush.bf16.msra.mxu0 %v456
    %466 = vmatmul.bf16.gmra.mxu0 %v453
    %v467 = vpop.f32.mrf.mxu0
    %v468 = vadd.f32 0.0, %v467
    %v469 = vpop.f32.mrf.mxu0
    %470 = vdwg.mxu0
    %471 = vrot.lane.b32.xlu0 %v182, 64
    %v472 = vpop.permute.xlu0 %471
    %v474 = vsel %vm136, %v422, 0
    %v477 = vsel %vm433, %v472, 0
    %479 = vmatpush.bf16.msra.mxu0 0
    %480 = vmatpush.bf16.msra.mxu0 0
    %481 = vmatpush.bf16.msra.mxu0 0
    %482 = vmatpush.bf16.msra.mxu0 0
    %483 = vmatpush.bf16.msra.mxu0 0
    %484 = vmatpush.bf16.msra.mxu0 0
    %485 = vmatpush.bf16.msra.mxu0 0
    %486 = vmatpush.bf16.msra.mxu0 %v477
    %487 = vmatmul.bf16.gmra.mxu0 %v474
    %v488 = vpop.f32.mrf.mxu0
    %v489 = vadd.f32 0.0, %v488
    %v490 = vpop.f32.mrf.mxu0
    %491 = vdwg.mxu0
    %492 = vrot.lane.b32.xlu0 %v206, 64
    %v493 = vpop.permute.xlu0 %492
    %v495 = vsel %vm136, %v423, 0
    %v498 = vsel %vm433, %v493, 0
    %500 = vmatpush.bf16.msra.mxu0 0
    %501 = vmatpush.bf16.msra.mxu0 0
    %502 = vmatpush.bf16.msra.mxu0 0
    %503 = vmatpush.bf16.msra.mxu0 0
    %504 = vmatpush.bf16.msra.mxu0 0
    %505 = vmatpush.bf16.msra.mxu0 0
    %506 = vmatpush.bf16.msra.mxu0 0
    %507 = vmatpush.bf16.msra.mxu0 %v498
    %508 = vmatmul.bf16.gmra.mxu0 %v495
    %v509 = vpop.f32.mrf.mxu0
    %v510 = vadd.f32 0.0, %v509
    %v511 = vpop.f32.mrf.mxu0
    %512 = vdwg.mxu0
    %513 = vrot.lane.b32.xlu0 %v230, 64
    %v514 = vpop.permute.xlu0 %513
    %v516 = vsel %vm136, %v424, 0
    %v519 = vsel %vm433, %v514, 0
    %521 = vmatpush.bf16.msra.mxu0 0
    %522 = vmatpush.bf16.msra.mxu0 0
    %523 = vmatpush.bf16.msra.mxu0 0
    %524 = vmatpush.bf16.msra.mxu0 0
    %525 = vmatpush.bf16.msra.mxu0 0
    %526 = vmatpush.bf16.msra.mxu0 0
    %527 = vmatpush.bf16.msra.mxu0 0
    %528 = vmatpush.bf16.msra.mxu0 %v519
    %529 = vmatmul.bf16.gmra.mxu0 %v516
    %v530 = vpop.f32.mrf.mxu0
    %v531 = vadd.f32 0.0, %v530
    %v532 = vpop.f32.mrf.mxu0
    %533 = vdwg.mxu0
    %534 = vrot.lane.b32.xlu0 %v254, 64
    %v535 = vpop.permute.xlu0 %534
    %v537 = vsel %vm136, %v425, 0
    %v540 = vsel %vm433, %v535, 0
    %542 = vmatpush.bf16.msra.mxu0 0
    %543 = vmatpush.bf16.msra.mxu0 0
    %544 = vmatpush.bf16.msra.mxu0 0
    %545 = vmatpush.bf16.msra.mxu0 0
    %546 = vmatpush.bf16.msra.mxu0 0
    %547 = vmatpush.bf16.msra.mxu0 0
    %548 = vmatpush.bf16.msra.mxu0 0
    %549 = vmatpush.bf16.msra.mxu0 %v540
    %550 = vmatmul.bf16.gmra.mxu0 %v537
    %v551 = vpop.f32.mrf.mxu0
    %v552 = vadd.f32 0.0, %v551
    %v553 = vpop.f32.mrf.mxu0
    %554 = vdwg.mxu0
    %555 = vrot.lane.b32.xlu0 %v278, 64
    %v556 = vpop.permute.xlu0 %555
    %v558 = vsel %vm136, %v426, 0
    %v561 = vsel %vm433, %v556, 0
    %563 = vmatpush.bf16.msra.mxu0 0
    %564 = vmatpush.bf16.msra.mxu0 0
    %565 = vmatpush.bf16.msra.mxu0 0
    %566 = vmatpush.bf16.msra.mxu0 0
    %567 = vmatpush.bf16.msra.mxu0 0
    %568 = vmatpush.bf16.msra.mxu0 0
    %569 = vmatpush.bf16.msra.mxu0 0
    %570 = vmatpush.bf16.msra.mxu0 %v561
    %571 = vmatmul.bf16.gmra.mxu0 %v558
    %v572 = vpop.f32.mrf.mxu0
    %v573 = vadd.f32 0.0, %v572
    %v574 = vpop.f32.mrf.mxu0
    %575 = vdwg.mxu0
    %576 = vrot.lane.b32.xlu0 %v302, 64
    %v577 = vpop.permute.xlu0 %576
    %v579 = vsel %vm136, %v427, 0
    %v582 = vsel %vm433, %v577, 0
    %584 = vmatpush.bf16.msra.mxu0 0
    %585 = vmatpush.bf16.msra.mxu0 0
    %586 = vmatpush.bf16.msra.mxu0 0
    %587 = vmatpush.bf16.msra.mxu0 0
    %588 = vmatpush.bf16.msra.mxu0 0
    %589 = vmatpush.bf16.msra.mxu0 0
    %590 = vmatpush.bf16.msra.mxu0 0
    %591 = vmatpush.bf16.msra.mxu0 %v582
    %592 = vmatmul.bf16.gmra.mxu0 %v579
    %v593 = vpop.f32.mrf.mxu0
    %v594 = vadd.f32 0.0, %v593
    %v595 = vpop.f32.mrf.mxu0
    %596 = vdwg.mxu0
    %598 = vrot.lane.b32.xlu0 %v468, 8
    %v599 = vpop.permute.xlu0 %598
    %602 = vrot.lane.b32.xlu0 %v489, 16
    %v603 = vpop.permute.xlu0 %602
    %606 = vrot.lane.b32.xlu0 %v510, 24
    %v607 = vpop.permute.xlu0 %606
    %v609 = vsel %vm136, %v447, %v599
    %vm610 = vcmask 130048
    %v611 = vsel %vm610, %v609, %v603
    %vm612 = vcmask 195584
    %v613 = vsel %vm612, %v611, %v607
    %615 = vrot.lane.b32.xlu0 %v552, 8
    %v616 = vpop.permute.xlu0 %615
    %619 = vrot.lane.b32.xlu0 %v573, 16
    %v620 = vpop.permute.xlu0 %619
    %623 = vrot.lane.b32.xlu0 %v594, 24
    %v624 = vpop.permute.xlu0 %623
    %v626 = vsel %vm136, %v531, %v616
    %v627 = vsel %vm610, %v626, %v620
    %v628 = vsel %vm612, %v627, %v624
    %v629 = vpack.c.bf16 %v628, %v613
    %v630 = vld [vmem:[%s3] sm:$0xf]
    %v631 = vld [vmem:[%s3 + $0x4] sm:$0xf]
    %v632 = vld [vmem:[%s3 + $0x8] sm:$0xf]
    %v633 = vld [vmem:[%s3 + $0xc] sm:$0xf]
    %v634 = vld [vmem:[%s4] sm:$0x1]
    %v636 = vperm.slane %v634, 0
    %v642 = vunpack.c.l.b16 %v630
    %v643 = vunpack.c.l.b16 %v631
    %v644 = vunpack.c.l.b16 %v632
    %v645 = vunpack.c.l.b16 %v633
    %v646 = vpack.c.b16 %v643, %v642
    %v647 = vpack.c.b16 %v645, %v644
    %v651 = vsel %vm85, %v629, 0
    %653 = vmatpush.bf16.msra.mxu0 0
    %654 = vmatpush.bf16.msra.mxu0 0
    %655 = vmatpush.bf16.msra.mxu0 0
    %656 = vmatpush.bf16.msra.mxu0 0
    %657 = vmatpush.bf16.msra.mxu0 0
    %658 = vmatpush.bf16.msra.mxu0 0
    %659 = vmatpush.bf16.msra.mxu0 %v647
    %660 = vmatpush.bf16.msra.mxu0 %v646
    %661 = vmatmul.bf16.gmra.mxu0 %v651
    %v662 = vpop.f32.mrf.mxu0
    %v663 = vadd.f32 %v636, %v662
    %v664 = vpop.f32.mrf.mxu0
    %v665 = vadd.f32 %v636, %v664
    %666 = vdwg.mxu0
    %v667 = vadd.f32 %v62, %v663
    %v668 = vadd.f32 %v63, %v665
    %v669 = vld [vmem:[%s5] sm:$0x1]
    %v670 = vld [vmem:[%s6] sm:$0x1]
    %v671 = vsel %vm85, %v667, 0.0
    %672 = vadd.xlane.f32.xlu0 %v671
    %v673 = vpop.xlane.xlu0 %672
    %v674 = vsel %vm85, %v668, 0.0
    %675 = vadd.xlane.f32.xlu0 %v674
    %v676 = vpop.xlane.xlu0 %675
    %v677 = vrcp.pop 32.0
    %v678 = vmul.f32 32.0, %v677
    %v679 = vsub.f32 1.0, %v678
    %v680 = vmul.f32 %v677, %v679
    %v681 = vadd.f32 %v677, %v680
    %vm682 = vweird.f32 %v677
    %v683 = vsel %vm682, %v677, %v681
    %v684 = vmul.f32 %v673, %v683
    %v685 = vmul.f32 %v676, %v683
    %v686 = vsub.f32 %v667, %v684
    %v687 = vsub.f32 %v668, %v685
    %v688 = vmul.f32 %v686, %v686
    %v689 = vmul.f32 %v687, %v687
    %v690 = vsel %vm85, %v688, 0.0
    %691 = vadd.xlane.f32.xlu0 %v690
    %v692 = vpop.xlane.xlu0 %691
    %v693 = vsel %vm85, %v689, 0.0
    %694 = vadd.xlane.f32.xlu0 %v693
    %v695 = vpop.xlane.xlu0 %694
    %v696 = vmul.f32 %v692, %v683
    %v697 = vmul.f32 %v695, %v683
    %v698 = vadd.f32 %v696, 1e-05
    %v699 = vadd.f32 %v697, 1e-05
    %v700 = vrsqrt.pop %v698
    %v701 = vmul.f32 %v700, %v698
    %v702 = vmul.f32 %v701, %v700
    %v703 = vmul.f32 0.5, %v702
    %v704 = vsub.f32 1.5, %v703
    %v705 = vmul.f32 %v700, %v704
    %vm706 = vweird.f32 %v698
    %vm707 = vweird.f32 %v700
    %vm708 = vmor %vm706, %vm707
    %v709 = vsel %vm708, %v700, %v705
    %v710 = vrsqrt.pop %v699
    %v711 = vmul.f32 %v710, %v699
    %v712 = vmul.f32 %v711, %v710
    %v713 = vmul.f32 0.5, %v712
    %v714 = vsub.f32 1.5, %v713
    %v715 = vmul.f32 %v710, %v714
    %vm716 = vweird.f32 %v699
    %vm717 = vweird.f32 %v710
    %vm718 = vmor %vm716, %vm717
    %v719 = vsel %vm718, %v710, %v715
    %v720 = vmul.f32 %v686, %v709
    %v721 = vmul.f32 %v687, %v719
    %v723 = vperm.slane %v669, 0
    %v725 = vmul.f32 %v720, %v723
    %v726 = vmul.f32 %v721, %v723
    %v728 = vperm.slane %v670, 0
    %v730 = vadd.f32 %v725, %v728
    %v731 = vadd.f32 %v726, %v728
    %v732 = vpack.c.bf16 %v731, %v730
    %v733 = vld [vmem:[#allocation2] sm:$0xf]
    %v734 = vld [vmem:[#allocation2 + $0x4] sm:$0xf]
    %v735 = vld [vmem:[#allocation2 + $0x8] sm:$0xf]
    %v736 = vld [vmem:[#allocation2 + $0xc] sm:$0xf]
    %v737 = vld [vmem:[%s8] sm:$0x1]
    %v739 = vperm.slane %v737, 0
    %v745 = vunpack.c.l.b16 %v733
    %v746 = vunpack.c.l.b16 %v734
    %v747 = vunpack.c.l.b16 %v735
    %v748 = vunpack.c.l.b16 %v736
    %v749 = vpack.c.b16 %v746, %v745
    %v750 = vpack.c.b16 %v748, %v747
    %v754 = vsel %vm85, %v732, 0
    %756 = vmatpush.bf16.msra.mxu0 0
    %757 = vmatpush.bf16.msra.mxu0 0
    %758 = vmatpush.bf16.msra.mxu0 0
    %759 = vmatpush.bf16.msra.mxu0 0
    %760 = vmatpush.bf16.msra.mxu0 0
    %761 = vmatpush.bf16.msra.mxu0 0
    %762 = vmatpush.bf16.msra.mxu0 %v750
    %763 = vmatpush.bf16.msra.mxu0 %v749
    %764 = vmatmul.bf16.gmra.mxu0 %v754
    %v765 = vpop.f32.mrf.mxu0
    %v766 = vadd.f32 %v739, %v765
    %v767 = vpop.f32.mrf.mxu0
    %v768 = vadd.f32 %v739, %v767
    %769 = vdwg.mxu0
    %v770 = vmax.f32 %v766, 0.0
    %v771 = vmax.f32 %v768, 0.0
    %v772 = vpack.c.bf16 %v771, %v770
    %v773 = vld [vmem:[%s9] sm:$0xf]
    %v774 = vld [vmem:[%s9 + $0x4] sm:$0xf]
    %v775 = vld [vmem:[%s9 + $0x8] sm:$0xf]
    %v776 = vld [vmem:[%s9 + $0xc] sm:$0xf]
    %v777 = vld [vmem:[%s9 + $0x10] sm:$0xf]
    %v778 = vld [vmem:[%s9 + $0x14] sm:$0xf]
    %v779 = vld [vmem:[%s9 + $0x18] sm:$0xf]
    %v780 = vld [vmem:[%s9 + $0x1c] sm:$0xf]
    %v781 = vld [vmem:[%s10] sm:$0x1]
    %v783 = vperm.slane %v781, 0
    %v793 = vunpack.c.l.b16 %v773
    %v794 = vunpack.c.l.b16 %v774
    %v795 = vunpack.c.l.b16 %v775
    %v796 = vunpack.c.l.b16 %v776
    %v797 = vunpack.c.l.b16 %v777
    %v798 = vunpack.c.l.b16 %v778
    %v799 = vunpack.c.l.b16 %v779
    %v800 = vunpack.c.l.b16 %v780
    %v801 = vpack.c.b16 %v794, %v793
    %v802 = vpack.c.b16 %v796, %v795
    %v803 = vpack.c.b16 %v798, %v797
    %v804 = vpack.c.b16 %v800, %v799
    %vm809 = vcmask 523264
    %v811 = vsel %vm809, %v772, 0
    %813 = vmatpush.bf16.msra.mxu0 0
    %814 = vmatpush.bf16.msra.mxu0 0
    %815 = vmatpush.bf16.msra.mxu0 0
    %816 = vmatpush.bf16.msra.mxu0 0
    %817 = vmatpush.bf16.msra.mxu0 %v804
    %818 = vmatpush.bf16.msra.mxu0 %v803
    %819 = vmatpush.bf16.msra.mxu0 %v802
    %820 = vmatpush.bf16.msra.mxu0 %v801
    %821 = vmatmul.bf16.gmra.mxu0 %v811
    %v822 = vpop.f32.mrf.mxu0
    %v823 = vadd.f32 %v783, %v822
    %v824 = vpop.f32.mrf.mxu0
    %v825 = vadd.f32 %v783, %v824
    %826 = vdwg.mxu0
    %v827 = vadd.f32 %v730, %v823
    %v828 = vadd.f32 %v731, %v825
    %v829 = vld [vmem:[%s11] sm:$0x1]
    %v830 = vld [vmem:[%s12] sm:$0x1]
    %v831 = vsel %vm85, %v827, 0.0
    %832 = vadd.xlane.f32.xlu0 %v831
    %v833 = vpop.xlane.xlu0 %832
    %v834 = vsel %vm85, %v828, 0.0
    %835 = vadd.xlane.f32.xlu0 %v834
    %v836 = vpop.xlane.xlu0 %835
    %v837 = vmul.f32 %v833, %v683
    %v838 = vmul.f32 %v836, %v683
    %v839 = vsub.f32 %v827, %v837
    %v840 = vsub.f32 %v828, %v838
    %v841 = vmul.f32 %v839, %v839
    %v842 = vmul.f32 %v840, %v840
    %v843 = vsel %vm85, %v841, 0.0
    %844 = vadd.xlane.f32.xlu0 %v843
    %v845 = vpop.xlane.xlu0 %844
    %v846 = vsel %vm85, %v842, 0.0
    %847 = vadd.xlane.f32.xlu0 %v846
    %v848 = vpop.xlane.xlu0 %847
    %v849 = vmul.f32 %v845, %v683
    %v850 = vmul.f32 %v848, %v683
    %v851 = vadd.f32 %v849, 1e-05
    %v852 = vadd.f32 %v850, 1e-05
    %v853 = vrsqrt.pop %v851
    %v854 = vmul.f32 %v853, %v851
    %v855 = vmul.f32 %v854, %v853
    %v856 = vmul.f32 0.5, %v855
    %v857 = vsub.f32 1.5, %v856
    %v858 = vmul.f32 %v853, %v857
    %vm859 = vweird.f32 %v851
    %vm860 = vweird.f32 %v853
    %vm861 = vmor %vm859, %vm860
    %v862 = vsel %vm861, %v853, %v858
    %v863 = vrsqrt.pop %v852
    %v864 = vmul.f32 %v863, %v852
    %v865 = vmul.f32 %v864, %v863
    %v866 = vmul.f32 0.5, %v865
    %v867 = vsub.f32 1.5, %v866
    %v868 = vmul.f32 %v863, %v867
    %vm869 = vweird.f32 %v852
    %vm870 = vweird.f32 %v863
    %vm871 = vmor %vm869, %vm870
    %v872 = vsel %vm871, %v863, %v868
    %v873 = vmul.f32 %v839, %v862
    %v874 = vmul.f32 %v840, %v872
    %v876 = vperm.slane %v829, 0
    %v878 = vmul.f32 %v873, %v876
    %v879 = vmul.f32 %v874, %v876
    %v881 = vperm.slane %v830, 0
    %v883 = vadd.f32 %v878, %v881
    %v884 = vadd.f32 %v879, %v881
    %885 = vst.msk [vmem:[#allocation5] sm:$0xff] %vm85, %v883
    %886 = vst.msk [vmem:[#allocation5 + $0x8] sm:$0xff] %vm85, %v884
    // Predicated region
    $region58: #{tpu_custom_call.1} parent=1 // pred_check
      _
    $region59: #{tpu_custom_call.1} parent=1 // pred_check_branch
      %888 = sbr.rel (0) target = $region61
    $region60: #{tpu_custom_call.1} parent=1 // pred_region
      %890 = vsyncadd [#allocation4], 0
      %s891 = sshll.u32 [#allocation5], 4
      %s892 = int_to_ptr.vmem [resolvable:$true] %s891
      %s893 = sshll.u32 %s13, 4
      %s894 = int_to_ptr.hbm [resolvable:$true] %s893
      %899 = dma.vmem_to_hbm [thread:$0]  %s892, 256, %s894, [#allocation4], 128, 128, 8
    $region61: #{tpu_custom_call.1} parent=1 // pred_fallthru
      _
    // Predicated region
    $region62: #{tpu_custom_call.1} parent=1 // pred_check
      _
    $region63: #{tpu_custom_call.1} parent=1 // pred_check_branch
      %901 = sbr.rel (0) target = $region65
    $region64: #{tpu_custom_call.1} parent=1 // pred_region
      %903 = dma.done [#allocation4], 256
    $region65: #{tpu_custom_call.1} parent=1 // pred_fallthru
      _
    %904 = vsyncpa [#allocation3], 1
    %905 = vsyncpa [#allocation4], 1

</llo_original>
